<compile_context>
chip_gen: v7x
topology: tpu7x:2x2x1
jax: 0.10.0
libtpu: 0.0.40
codegen_flags: <defaults>
</compile_context>

<pallas_src>
import jax
import jax.numpy as jnp
from jax import lax
from jax.experimental import pallas as pl
from jax.experimental.pallas import tpu as pltpu

# Module defaults.
ALPHA = 1.0
GAMMA = 2.0  # gamma == 2 -> explicit square below (no float pow / extra EUP ops)

LANES = 128
SUBLANES = 8


def _round_up(x, m):
    return ((x + m - 1) // m) * m


def _make_focal_kernel(chunk_rows, num_chunks, binary_fast_path):
    """Kernel factory: tile is processed in `num_chunks` chunks of
    `chunk_rows` rows, accumulating an (8, 128) f32 partial."""

    def kernel(x_ref, t_ref, out_ref):
        def chunk_partial(i, acc):
            start = pl.multiple_of(i * chunk_rows, chunk_rows)
            x = x_ref[pl.ds(start, chunk_rows), :].astype(jnp.float32)
            t = t_ref[pl.ds(start, chunk_rows), :].astype(jnp.float32)

            if binary_fast_path:
                # Binary targets only: p_sel = x if t==1 else (1-x).
                # 1 transcendental/elem (log) instead of 3 (2 logs + exp).
                p_sel = t * x + (1.0 - t) * (1.0 - x)
                bce = -jnp.maximum(jnp.log(p_sel), -100.0)
                pt = p_sel
            else:
                # Exact PyTorch semantics (works for soft targets):
                # BCE = -(t*log(x) + (1-t)*log(1-x)), logs clamped >= -100.
                log_x = jnp.maximum(jnp.log(x), -100.0)
                log_1mx = jnp.maximum(jnp.log(1.0 - x), -100.0)
                bce = -(t * log_x + (1.0 - t) * log_1mx)
                pt = jnp.exp(-bce)

            om = 1.0 - pt
            f_loss = ALPHA * (om * om) * bce  # gamma == 2

            # Reduce the chunk to one (8, 128) block with pure VPU adds; the
            # reshape groups whole sublane tiles so it is layout-preserving.
            partial = f_loss.reshape(
                chunk_rows // SUBLANES, SUBLANES, LANES
            ).sum(axis=0)
            return acc + partial

        acc0 = jnp.zeros((SUBLANES, LANES), jnp.float32)
        # Short fixed trip-count -> unroll for LLO scheduler visibility.
        out_ref[...] = lax.fori_loop(0, num_chunks, chunk_partial, acc0,
                                     unroll=True)

    return kernel


def focal_loss(inputs, targets, *, tile_rows=None, binary_targets=False,
               cast_targets_to_bf16=False):
    """Mean focal loss (alpha=1, gamma=2, logits=False, reduce=True).

    binary_targets=True enables the 1-transcendental fast path (only valid
    when targets are exactly 0/1).  cast_targets_to_bf16=True halves the
    target HBM stream (exact for 0/1 targets)."""
    assert inputs.shape == targets.shape
    total = inputs.size

    if cast_targets_to_bf16:
        targets = targets.astype(jnp.bfloat16)

    itemsize = jnp.dtype(inputs.dtype).itemsize
    # bf16/fp16 native tile is (16, 128); f32 is (8, 128).
    row_multiple = 16 if itemsize == 2 else SUBLANES
    if tile_rows is None:
        tile_rows = 8192 if itemsize == 2 else 4096

    # Tile size: big enough to amortize per-step overhead, clamped to the
    # (rounded-up) problem size so tiny inputs don't over-pad.
    m_rows_raw = -(-total // LANES)
    tr = min(tile_rows, _round_up(m_rows_raw, row_multiple))
    tr = _round_up(tr, row_multiple)

    num_blocks = -(-total // (tr * LANES))
    padded_rows = num_blocks * tr
    padded_total = padded_rows * LANES

    # Inner chunk: <=512 rows, multiple of row_multiple, divides tr.  Bounds
    # the live f32 intermediates regardless of how big the DMA tile is.
    chunk = min(512, tr)
    chunk -= chunk % row_multiple
    while tr % chunk:
        chunk -= row_multiple
    num_chunks = tr // chunk

    # Pad with x=1, t=1: BCE and the focal term are exactly 0 for those
    # elements, so they contribute nothing to the sum; the mean divides by
    # the TRUE element count below.
    x1 = inputs.reshape(-1)
    t1 = targets.reshape(-1)
    pad = padded_total - total
    if pad:
        x1 = jnp.concatenate([x1, jnp.ones((pad,), dtype=x1.dtype)])
        t1 = jnp.concatenate([t1, jnp.ones((pad,), dtype=t1.dtype)])
    x2d = x1.reshape(padded_rows, LANES)
    t2d = t1.reshape(padded_rows, LANES)

    kernel = _make_focal_kernel(chunk, num_chunks, binary_targets)

    partials = pl.pallas_call(
        kernel,
        out_shape=jax.ShapeDtypeStruct(
            (num_blocks * SUBLANES, LANES), jnp.float32
        ),
        grid_spec=pltpu.PrefetchScalarGridSpec(
            num_scalar_prefetch=0,
            grid=(num_blocks,),
            in_specs=[
                pl.BlockSpec((tr, LANES), lambda i: (i, 0)),
                pl.BlockSpec((tr, LANES), lambda i: (i, 0)),
            ],
            out_specs=pl.BlockSpec((SUBLANES, LANES), lambda i: (i, 0)),
        ),
        compiler_params=pltpu.CompilerParams(
            # Independent partial blocks -> safe to shard across TensorCores.
            # (If a v7x profile shows an idle TC, switch to
            #  pltpu.CORE_PARALLEL — second-order; not needed for correctness.)
            dimension_semantics=("parallel",),
            # Raise v5e's 16 MiB scoped default so the larger tiles
            # (2 inputs x 2 buffers x ~2 MiB) always fit; same value is the
            # default on v6e/v7x so this is a no-op there.
            vmem_limit_bytes=32 << 20,
        ),
    )(x2d, t2d)

    # reduce=True -> torch.mean over all (true) elements.  One cheap
    # cross-lane reduction over (num_blocks*8, 128) partials in plain XLA.
    return jnp.sum(partials) / jnp.float32(total)


def _focal_loss_ref(inputs, targets):
    """Pure-JAX reference with the same semantics as the PyTorch module."""
    x = inputs.astype(jnp.float32)
    t = targets.astype(jnp.float32)
    bce = -(
        t * jnp.maximum(jnp.log(x), -100.0)
        + (1.0 - t) * jnp.maximum(jnp.log(1.0 - x), -100.0)
    )
    pt = jnp.exp(-bce)
    return jnp.mean(ALPHA * (1.0 - pt) ** GAMMA * bce)


if __name__ == "__main__":
    key = jax.random.PRNGKey(0)
    k1, k2, k3, k4 = jax.random.split(key, 4)

    # ---- Test 1: NCHW probabilities (logits=False) with binary targets ----
    shape = (2, 4, 16, 16)  # 2048 elems = 16 rows x 128 lanes
    inputs = jax.random.uniform(
        k1, shape, dtype=jnp.float32, minval=0.01, maxval=0.99
    )
    targets = jax.random.bernoulli(k2, p=0.5, shape=shape).astype(jnp.float32)

    loss = jax.block_until_ready(focal_loss(inputs, targets))
    ref = _focal_loss_ref(inputs, targets)
    assert jnp.allclose(loss, ref, rtol=1e-5, atol=1e-6), (loss, ref)

    # Binary fast path (1 transcendental/elem) must match on 0/1 targets.
    loss_fast = jax.block_until_ready(
        focal_loss(inputs, targets, binary_targets=True)
    )
    assert jnp.allclose(loss_fast, ref, rtol=1e-4, atol=1e-6), (loss_fast, ref)

    # ---- Test 2: awkward (non-lane-divisible) shape exercises padding ----
    shape2 = (2, 3, 7, 5)  # 210 elems -> padded to one (8, 128) tile
    inputs2 = jax.random.uniform(
        k3, shape2, dtype=jnp.float32, minval=0.01, maxval=0.99
    )
    targets2 = jax.random.bernoulli(k4, p=0.5, shape=shape2).astype(jnp.float32)

    loss2 = jax.block_until_ready(focal_loss(inputs2, targets2))
    ref2 = _focal_loss_ref(inputs2, targets2)
    assert jnp.allclose(loss2, ref2, rtol=1e-5, atol=1e-6), (loss2, ref2)

    print("KERNEL_OK")
</pallas_src>

<mosaic_0001>
module attributes {stable_mosaic.version = 11 : i64} {
  func.func @kernel(%arg0: i32, %arg1: memref<16x128xf32, #tpu.memory_space<vmem>>, %arg2: memref<16x128xf32, #tpu.memory_space<vmem>>, %arg3: memref<8x128xf32, #tpu.memory_space<vmem>>) attributes {dimension_semantics = [#tpu.dimension_semantics<parallel>], iteration_bounds = array<i64: 1>, scalar_prefetch = 0 : i64, scratch_operands = 0 : i64, tpu.core_type = #tpu.core_type<tc>, window_params = [{transform_indices = @transform_0, window_bounds = array<i64: 16, 128>}, {transform_indices = @transform_1, window_bounds = array<i64: 16, 128>}, {transform_indices = @transform_2, window_bounds = array<i64: 8, 128>}]} {
    %cst = arith.constant 0.000000e+00 : f32
    %0 = vector.broadcast %cst : f32 to vector<8x128xf32>
    %c0_i32 = arith.constant 0 : i32
    %c16_i32 = arith.constant 16 : i32
    %1 = arith.muli %c0_i32, %c16_i32 : i32
    %2 = tpu.assume_multiple %1, 16 : i32
    %3 = arith.index_cast %2 : i32 to index
    %c0 = arith.constant 0 : index
    %4 = vector.load %arg1[%3, %c0] : memref<16x128xf32, #tpu.memory_space<vmem>>, vector<16x128xf32>
    %5 = arith.index_cast %2 : i32 to index
    %c0_0 = arith.constant 0 : index
    %6 = vector.load %arg2[%5, %c0_0] : memref<16x128xf32, #tpu.memory_space<vmem>>, vector<16x128xf32>
    %7 = math.log %4 : vector<16x128xf32>
    %cst_1 = arith.constant -1.000000e+02 : f32
    %8 = vector.broadcast %cst_1 : f32 to vector<16x128xf32>
    %9 = arith.maximumf %7, %8 : vector<16x128xf32>
    %cst_2 = arith.constant 1.000000e+00 : f32
    %10 = vector.broadcast %cst_2 : f32 to vector<16x128xf32>
    %11 = arith.subf %10, %4 : vector<16x128xf32>
    %12 = math.log %11 : vector<16x128xf32>
    %cst_3 = arith.constant -1.000000e+02 : f32
    %13 = vector.broadcast %cst_3 : f32 to vector<16x128xf32>
    %14 = arith.maximumf %12, %13 : vector<16x128xf32>
    %15 = arith.mulf %6, %9 : vector<16x128xf32>
    %cst_4 = arith.constant 1.000000e+00 : f32
    %16 = vector.broadcast %cst_4 : f32 to vector<16x128xf32>
    %17 = arith.subf %16, %6 : vector<16x128xf32>
    %18 = arith.mulf %17, %14 : vector<16x128xf32>
    %19 = arith.addf %15, %18 : vector<16x128xf32>
    %cst_5 = arith.constant 0.000000e+00 : f32
    %20 = vector.broadcast %cst_5 : f32 to vector<16x128xf32>
    %21 = arith.subf %20, %19 : vector<16x128xf32>
    %cst_6 = arith.constant 0.000000e+00 : f32
    %22 = vector.broadcast %cst_6 : f32 to vector<16x128xf32>
    %23 = arith.subf %22, %21 : vector<16x128xf32>
    %24 = math.exp %23 : vector<16x128xf32>
    %cst_7 = arith.constant 1.000000e+00 : f32
    %25 = vector.broadcast %cst_7 : f32 to vector<16x128xf32>
    %26 = arith.subf %25, %24 : vector<16x128xf32>
    %27 = arith.mulf %26, %26 : vector<16x128xf32>
    %cst_8 = arith.constant 1.000000e+00 : f32
    %28 = vector.broadcast %cst_8 : f32 to vector<16x128xf32>
    %29 = arith.mulf %28, %27 : vector<16x128xf32>
    %30 = arith.mulf %29, %21 : vector<16x128xf32>
    %31 = vector.shape_cast %30 : vector<16x128xf32> to vector<2x8x128xf32>
    %cst_9 = arith.constant dense<0.000000e+00> : vector<8x128xf32>
    %32 = vector.multi_reduction <add>, %31, %cst_9 [0] : vector<2x8x128xf32> to vector<8x128xf32>
    %33 = arith.addf %0, %32 : vector<8x128xf32>
    %c1_i32 = arith.constant 1 : i32
    %c0_10 = arith.constant 0 : index
    %c0_11 = arith.constant 0 : index
    %34 = vector.load %arg3[%c0_10, %c0_11] : memref<8x128xf32, #tpu.memory_space<vmem>>, vector<8x128xf32>
    tpu.vector_store %arg3[%c0_10, %c0_11], %33 {strides = array<i32>} : memref<8x128xf32, #tpu.memory_space<vmem>>, vector<8x128xf32>,
    return
  }
  func.func @transform_0(%arg0: i32) -> (i32, i32) {
    %c0_i32 = arith.constant 0 : i32
    %c0_i32_0 = arith.constant 0 : i32
    return %arg0, %c0_i32 : i32, i32
  }
  func.func @transform_1(%arg0: i32) -> (i32, i32) {
    %c0_i32 = arith.constant 0 : i32
    %c0_i32_0 = arith.constant 0 : i32
    return %arg0, %c0_i32 : i32, i32
  }
  func.func @transform_2(%arg0: i32) -> (i32, i32) {
    %c0_i32 = arith.constant 0 : i32
    %c0_i32_0 = arith.constant 0 : i32
    return %arg0, %c0_i32 : i32, i32
  }
}

</mosaic_0001>

<llo_original>
// kernel: tpu_custom_call.1
$region0: #{tpu_custom_call.1}
  #allocation0 [shape = 'u32[]', space=smem, size = 0x4, offset = 0x4, fixed_abs, tag = 'smem constant byte address 0x4 - core index']
  #allocation1 [shape = 'u32[144,128]{1,0:T(1,128)}', space=vmem, size = 0x12000, scoped, tag = 'internal scratch']
  %s0 = inlined_call_operand.hbm [shape: f32[16,128], index: 0, kind: input, shape index: {}]
  %s1 = inlined_call_operand.hbm [shape: f32[16,128], index: 1, kind: input, shape index: {}]
  %s2 = inlined_call_operand.hbm [shape: f32[8,128], index: 2, kind: output, shape index: {}]
  %s3 = sld [smem:[#allocation0]]
  $region26: #{tpu_custom_call.1} parent=0
    _
  %s5 = ssub.s32 1, %s3
  %s6 = scalar_select 0, %s5, %s3
  $region1: #{tpu_custom_call.1} parent=0
    #allocation2 [shape = 'u8[8192]{0}', space=vmem, size = 0x2000, scoped, tag = 'input window, operand 0, single buffered']
    #allocation3 [shape = 's32[1]{0}', space=sflag, size = 0x4, scoped, tag = 'scoped memory for tpu_custom_call.1']
    #allocation4 [shape = 's32[1]{0}', space=sflag, size = 0x4, scoped, tag = 'scoped memory for tpu_custom_call.1']
    #allocation5 [shape = 'u8[8192]{0}', space=vmem, size = 0x2000, scoped, tag = 'input window, operand 1, single buffered']
    #allocation6 [shape = 's32[1]{0}', space=sflag, size = 0x4, scoped, tag = 'scoped memory for tpu_custom_call.1']
    #allocation7 [shape = 'u8[4096]{0}', space=vmem, size = 0x1000, scoped, tag = 'output window, operand 0, single buffered']
    %7 = vsyncpa [#allocation3], 0
    %8 = vsyncpa [#allocation6], 0
    %9 = vsyncpa [#allocation4], 0
    // Predicated region
    $region2: #{tpu_custom_call.1} parent=1 // pred_check
      _
    $region3: #{tpu_custom_call.1} parent=1 // pred_check_branch
      %11 = sbr.rel (0) target = $region5
    $region4: #{tpu_custom_call.1} parent=1 // pred_region
      %s13 = ssub.s32 256, 256
      %14 = vsyncadd [#allocation3], %s13
      %s15 = sshll.u32 [#allocation2], 4
      %s16 = int_to_ptr.vmem [resolvable:$true] %s15
      %21 = dma.hbm_to_vmem [thread:$0]  %s0, 256, %s16, [#allocation3], 128, 128, 8
    $region5: #{tpu_custom_call.1} parent=1 // pred_fallthru
      _
    // Predicated region
    $region6: #{tpu_custom_call.1} parent=1 // pred_check
      _
    $region7: #{tpu_custom_call.1} parent=1 // pred_check_branch
      %23 = sbr.rel (0) target = $region9
    $region8: #{tpu_custom_call.1} parent=1 // pred_region
      %s25 = ssub.s32 256, 256
      %26 = vsyncadd [#allocation6], %s25
      %s27 = sshll.u32 [#allocation5], 4
      %s28 = int_to_ptr.vmem [resolvable:$true] %s27
      %33 = dma.hbm_to_vmem [thread:$0]  %s1, 256, %s28, [#allocation6], 128, 128, 8
    $region9: #{tpu_custom_call.1} parent=1 // pred_fallthru
      _
    // Predicated region
    $region10: #{tpu_custom_call.1} parent=1 // pred_check
      _
    $region11: #{tpu_custom_call.1} parent=1 // pred_check_branch
      %35 = sbr.rel (0) target = $region13
    $region12: #{tpu_custom_call.1} parent=1 // pred_region
      %36 = dma.done [#allocation3], 256
    $region13: #{tpu_custom_call.1} parent=1 // pred_fallthru
      _
    // Predicated region
    $region14: #{tpu_custom_call.1} parent=1 // pred_check
      _
    $region15: #{tpu_custom_call.1} parent=1 // pred_check_branch
      %38 = sbr.rel (0) target = $region17
    $region16: #{tpu_custom_call.1} parent=1 // pred_region
      %39 = dma.done [#allocation6], 256
    $region17: #{tpu_custom_call.1} parent=1 // pred_fallthru
      _
    %v40 = vld [vmem:[#allocation2] sm:$0xff]
    %v41 = vld [vmem:[#allocation2 + $0x8] sm:$0xff]
    %v42 = vld [vmem:[#allocation5] sm:$0xff]
    %v43 = vld [vmem:[#allocation5 + $0x8] sm:$0xff]
    %v44 = vlog2.pop %v40
    %v45 = vmul.f32 %v44, 0.6931472
    %v46 = vlog2.pop %v41
    %v47 = vmul.f32 %v46, 0.6931472
    %v48 = vmax.f32 %v45, -100.0
    %v49 = vmax.f32 %v47, -100.0
    %v50 = vsub.f32 1.0, %v40
    %v51 = vsub.f32 1.0, %v41
    %v52 = vlog2.pop %v50
    %v53 = vmul.f32 %v52, 0.6931472
    %v54 = vlog2.pop %v51
    %v55 = vmul.f32 %v54, 0.6931472
    %v56 = vmax.f32 %v53, -100.0
    %v57 = vmax.f32 %v55, -100.0
    %v58 = vmul.f32 %v42, %v48
    %v59 = vmul.f32 %v43, %v49
    %v60 = vsub.f32 1.0, %v42
    %v61 = vsub.f32 1.0, %v43
    %v62 = vmul.f32 %v60, %v56
    %v63 = vmul.f32 %v61, %v57
    %v64 = vadd.f32 %v58, %v62
    %v65 = vadd.f32 %v59, %v63
    %v66 = vsub.f32 0.0, %v64
    %v67 = vsub.f32 0.0, %v65
    %v68 = vsub.f32 0.0, %v66
    %v69 = vsub.f32 0.0, %v67
    %v70 = vmul.f32 %v68, 1.442695
    %v71 = vpow.pop %v70
    %v72 = vmul.f32 %v69, 1.442695
    %v73 = vpow.pop %v72
    %v74 = vsub.f32 1.0, %v71
    %v75 = vsub.f32 1.0, %v73
    %v76 = vmul.f32 %v74, %v74
    %v77 = vmul.f32 %v75, %v75
    %v78 = vmul.f32 %v76, %v66
    %v79 = vmul.f32 %v77, %v67
    %v80 = vadd.f32 %v78, %v79
    %v81 = vadd.f32 %v80, 0.0
    %82 = vst [vmem:[#allocation7] sm:$0xff] %v81
    // Predicated region
    $region18: #{tpu_custom_call.1} parent=1 // pred_check
      _
    $region19: #{tpu_custom_call.1} parent=1 // pred_check_branch
      %84 = sbr.rel (0) target = $region21
    $region20: #{tpu_custom_call.1} parent=1 // pred_region
      %s86 = ssub.s32 128, 128
      %87 = vsyncadd [#allocation4], %s86
      %s89 = sshll.u32 [#allocation7], 4
      %s90 = int_to_ptr.vmem [resolvable:$true] %s89
      %92 = dma.vmem_to_hbm [thread:$0]  %s90, 128, %s2, [#allocation4]
    $region21: #{tpu_custom_call.1} parent=1 // pred_fallthru
      _
    // Predicated region
    $region22: #{tpu_custom_call.1} parent=1 // pred_check
      _
    $region23: #{tpu_custom_call.1} parent=1 // pred_check_branch
      %94 = sbr.rel (0) target = $region25
    $region24: #{tpu_custom_call.1} parent=1 // pred_region
      %95 = dma.done [#allocation4], 128
    $region25: #{tpu_custom_call.1} parent=1 // pred_fallthru
      _
    %96 = vsyncpa [#allocation3], 1
    %97 = vsyncpa [#allocation6], 1
    %98 = vsyncpa [#allocation4], 1

</llo_original>
